<compile_context>
chip_gen: v7x
topology: tpu7x:2x2x1
jax: 0.10.0
libtpu: 0.0.40
codegen_flags: <defaults>
</compile_context>

<pallas_src>
import jax
import jax.numpy as jnp
from jax import lax
from jax.experimental import pallas as pl
from jax.experimental.pallas import tpu as pltpu

BN_EPS = 1e-5


# ------------------------------ Pallas kernel -------------------------------- #
def _make_block_kernel(H, W, B, Cx, Cs, Cout):
    """Fused DecoderBlock: upsample -> [concat] -> conv3x3+BN+ReLU -> conv3x3+BN+ReLU.

    All activations are channel-first (C, B*H*W) slabs (batch*spatial on the lane axis).
    """
    HW = H * W
    N = B * HW
    PAD = W + 1                    # enough headroom for the +/-(W+1) tap offsets

    def tap_slabs(x_cf, m_all):
        """9 shifted + edge-masked (Cin, N) views of x_cf, tap order t = dh*3 + dw."""
        cin = x_cf.shape[0]
        zp = jnp.zeros((cin, PAD), dtype=x_cf.dtype)
        xf = jnp.concatenate([zp, x_cf, zp], axis=1)          # (Cin, N + 2*PAD)
        slabs = []
        for t in range(9):
            dh, dw = divmod(t, 3)
            start = PAD + (dh - 1) * W + (dw - 1)             # static offset
            slab = xf[:, start:start + N]                     # (Cin, N)
            if t != 4:                                        # center tap needs no mask
                slab = slab * m_all[t:t + 1, :]               # (1, N) {0,1} bf16, broadcasts
            slabs.append(slab)
        return slabs

    def conv(stacked, w_ref, b_ref):
        # single big-K MXU matmul: (Cout, K) @ (K, N) -> f32 acc, then bias + ReLU
        acc = jnp.dot(w_ref[...], stacked, preferred_element_type=jnp.float32)
        return jnp.maximum(acc + b_ref[...], 0.0)

    def body(x_ref, s_ref, u_ref, m_ref, w1_ref, b1_ref, w2_ref, b2_ref, o_ref):
        m_all = m_ref[...]                                    # (9, N) bf16
        # fused nearest x2 upsample: exact one-hot matmul, (Cx, B*h*w) -> (Cx, N)
        x_up = jnp.dot(x_ref[...], u_ref[...],
                       preferred_element_type=jnp.float32).astype(jnp.bfloat16)
        slabs = tap_slabs(x_up, m_all)
        if s_ref is not None:
            # channel "concat" realized via the host-side weight split: just append skip taps
            slabs = slabs + tap_slabs(s_ref[...], m_all)
        stacked1 = jnp.concatenate(slabs, axis=0)             # (9*Cx [+ 9*Cs], N)
        y1 = conv(stacked1, w1_ref, b1_ref).astype(jnp.bfloat16)
        stacked2 = jnp.concatenate(tap_slabs(y1, m_all), axis=0)  # (9*Cout, N)
        o_ref[...] = conv(stacked2, w2_ref, b2_ref).astype(o_ref.dtype)

    if Cs > 0:
        def kernel(x_ref, s_ref, u_ref, m_ref, w1_ref, b1_ref, w2_ref, b2_ref, o_ref):
            body(x_ref, s_ref, u_ref, m_ref, w1_ref, b1_ref, w2_ref, b2_ref, o_ref)
    else:
        def kernel(x_ref, u_ref, m_ref, w1_ref, b1_ref, w2_ref, b2_ref, o_ref):
            body(x_ref, None, u_ref, m_ref, w1_ref, b1_ref, w2_ref, b2_ref, o_ref)
    return kernel


def decoder_block_pallas(x_flat, skip_flat, up_mat, tap_masks, w1, b1, w2, b2, B, H, W):
    """x_flat: (Cx, B*h*w) bf16 (pre-upsample); skip_flat: (Cs, B*H*W) bf16 or None.
    Returns (Cout, B*H*W) bf16."""
    Cx = x_flat.shape[0]
    Cs = 0 if skip_flat is None else skip_flat.shape[0]
    Cout = w1.shape[0]
    N = B * H * W
    kernel = _make_block_kernel(H, W, B, Cx, Cs, Cout)

    inputs = [x_flat]
    if skip_flat is not None:
        inputs.append(skip_flat)
    inputs += [up_mat, tap_masks, w1, b1, w2, b2]

    return pl.pallas_call(
        kernel,
        out_shape=jax.ShapeDtypeStruct((Cout, N), jnp.bfloat16),
        grid=(1,),
        in_specs=[pl.BlockSpec(a.shape, lambda i: (0, 0)) for a in inputs],
        out_specs=pl.BlockSpec((Cout, N), lambda i: (0, 0)),
        compiler_params=pltpu.CompilerParams(
            dimension_semantics=("arbitrary",),
            vmem_limit_bytes=32 * 1024 * 1024),
    )(*inputs)


# ------------------------------ parameter prep -------------------------------- #
def _fold_conv_bn_matrix(p, split=None):
    """Fold BN (inference) into the conv weights and reshape to the kernel's matmul layout.

    Returns (Cout, 9*Cin) bf16 (column order: tap-major, channel-minor; when `split` < Cin the
    columns are ordered [9*split x-channels | 9*(Cin-split) skip-channels]) and (Cout, 1) f32 bias.
    """
    w, gamma, beta, mean, var = p["w"], p["gamma"], p["beta"], p["mean"], p["var"]
    cin, cout = w.shape[2], w.shape[3]
    scale = gamma / jnp.sqrt(var + BN_EPS)                    # (Cout,)
    wf = w * scale                                            # (3,3,Cin,Cout) f32, BN folded

    def mat(part):                                            # -> (Cout, 9*Ci), K index = t*Ci + ci
        ci = part.shape[2]
        return jnp.transpose(part, (3, 0, 1, 2)).reshape(cout, 9 * ci)

    if split is None or split >= cin:
        wm = mat(wf)
    else:
        wm = jnp.concatenate([mat(wf[:, :, :split, :]), mat(wf[:, :, split:, :])], axis=1)
    bias = (beta - mean * scale).astype(jnp.float32).reshape(cout, 1)
    return wm.astype(jnp.bfloat16), bias


def _nearest2x_matrix(B, h, w):
    """One-hot matrix U (B*h*w, B*2h*2w) so that x_small @ U is the nearest x2 upsample."""
    H, W = 2 * h, 2 * w
    p = jnp.arange(B * H * W)
    b = p // (H * W)
    r = p % (H * W)
    i = (r // W) // 2
    j = (r % W) // 2
    src = b * (h * w) + i * w + j                             # source flat index per output pixel
    return (jnp.arange(B * h * w)[:, None] == src[None, :]).astype(jnp.bfloat16)


def _tap_edge_masks(B, H, W):
    """(9, B*H*W) {0,1} keep-masks zeroing each tap's out-of-image (SAME-pad / batch-crossing)
    contributions in the flat (C, B*H*W) layout."""
    N = B * H * W
    r = jnp.arange(N) % (H * W)
    i = r // W
    j = r % W
    rows = []
    for dh in range(3):
        for dw in range(3):
            m = jnp.ones((N,), jnp.float32)
            if dh == 0:
                m = m * (i != 0)
            if dh == 2:
                m = m * (i != H - 1)
            if dw == 0:
                m = m * (j != 0)
            if dw == 2:
                m = m * (j != W - 1)
            rows.append(m)
    return jnp.stack(rows, axis=0).astype(jnp.bfloat16)


# --------------------------------- decoder ------------------------------------ #
def unet_decoder_forward(params, *features):
    """features: NCHW tensors (same convention as the PyTorch module). Returns NCHW f32."""
    feats = list(features)[1:][::-1]
    head, skips = feats[0], feats[1:]
    B, c, h, w = head.shape
    # channel-first flat layout (C, B*h*w); center = Identity
    x = jnp.transpose(head.astype(jnp.bfloat16), (1, 0, 2, 3)).reshape(c, B * h * w)
    for i, blk in enumerate(params["blocks"]):
        H, W = 2 * h, 2 * w
        skip = skips[i] if i < len(skips) else None
        skip_flat = None
        if skip is not None:
            cs = skip.shape[1]
            skip_flat = jnp.transpose(skip.astype(jnp.bfloat16),
                                      (1, 0, 2, 3)).reshape(cs, B * H * W)
        cx = x.shape[0]
        w1, b1 = _fold_conv_bn_matrix(blk["conv1"], split=cx)
        w2, b2 = _fold_conv_bn_matrix(blk["conv2"])
        up_mat = _nearest2x_matrix(B, h, w)
        masks = _tap_edge_masks(B, H, W)
        # attention1/attention2 = Identity (attention_type=None)
        x = decoder_block_pallas(x, skip_flat, up_mat, masks, w1, b1, w2, b2, B, H, W)
        h, w = H, W
    cout = x.shape[0]
    return jnp.transpose(x.reshape(cout, B, h, w), (1, 0, 2, 3)).astype(jnp.float32)


# ---------------------------- pure-JAX reference ------------------------------- #
def _conv_bn_relu_ref(x, p):
    w, gamma, beta, mean, var = p["w"], p["gamma"], p["beta"], p["mean"], p["var"]
    scale = gamma / jnp.sqrt(var + BN_EPS)
    wf = (w * scale).astype(jnp.bfloat16)
    bias = (beta - mean * scale).astype(jnp.float32)
    y = lax.conv_general_dilated(x, wf, (1, 1), "SAME",
                                 dimension_numbers=("NCHW", "HWIO", "NCHW"),
                                 preferred_element_type=jnp.float32)
    return jnp.maximum(y + bias[None, :, None, None], 0.0)


def unet_decoder_ref(params, *features):
    feats = list(features)[1:][::-1]
    head, skips = feats[0], feats[1:]
    x = head.astype(jnp.bfloat16)
    for i, blk in enumerate(params["blocks"]):
        x = jnp.repeat(jnp.repeat(x, 2, axis=2), 2, axis=3)
        skip = skips[i] if i < len(skips) else None
        if skip is not None:
            x = jnp.concatenate([x, skip.astype(jnp.bfloat16)], axis=1)
        y = _conv_bn_relu_ref(x, blk["conv1"]).astype(jnp.bfloat16)
        x = _conv_bn_relu_ref(y, blk["conv2"]).astype(jnp.bfloat16)
    return x.astype(jnp.float32)


# --------------------------------- parameters ---------------------------------- #
def init_conv_bn(key, cin, cout):
    kw, kg, kb, km, kv = jax.random.split(key, 5)
    w = jax.random.normal(kw, (3, 3, cin, cout), jnp.float32) / jnp.sqrt(9.0 * cin)
    gamma = 1.0 + 0.1 * jax.random.normal(kg, (cout,), jnp.float32)
    beta = 0.1 * jax.random.normal(kb, (cout,), jnp.float32)
    mean = 0.1 * jax.random.normal(km, (cout,), jnp.float32)
    var = 0.5 + jax.random.uniform(kv, (cout,), jnp.float32)
    return dict(w=w, gamma=gamma, beta=beta, mean=mean, var=var)


def init_unet_decoder(key, encoder_channels, decoder_channels):
    enc = list(encoder_channels[1:])[::-1]          # drop first stage, reverse
    head_ch = enc[0]
    in_chs = [head_ch] + list(decoder_channels[:-1])
    skip_chs = list(enc[1:]) + [0]
    out_chs = list(decoder_channels)
    keys = jax.random.split(key, len(out_chs))
    blocks = []
    for bk, cin, cskip, cout in zip(keys, in_chs, skip_chs, out_chs):
        k1, k2 = jax.random.split(bk)
        blocks.append(dict(conv1=init_conv_bn(k1, cin + cskip, cout),
                           conv2=init_conv_bn(k2, cout, cout)))
    return dict(blocks=blocks)


# ------------------------------------ main -------------------------------------- #
if __name__ == "__main__":
    encoder_channels = (3, 8, 16, 32)   # encoder feature channels (incl. input stage)
    decoder_channels = (16, 8, 8)       # n_blocks = 3
    B, H, W = 2, 16, 16

    root = jax.random.PRNGKey(0)
    kparams, kfeat = jax.random.split(root)
    params = init_unet_decoder(kparams, encoder_channels, decoder_channels)

    # encoder features (NCHW), halved spatially at each stage: 16, 8, 4, 2
    fkeys = jax.random.split(kfeat, len(encoder_channels))
    features = []
    for s, (c, fk) in enumerate(zip(encoder_channels, fkeys)):
        hs, ws = H // (2 ** s), W // (2 ** s)
        features.append(jax.random.normal(fk, (B, c, hs, ws), jnp.float32))

    out = jax.block_until_ready(unet_decoder_forward(params, *features))
    ref = unet_decoder_ref(params, *features)

    assert out.shape == (B, decoder_channels[-1], H, W), out.shape
    max_err = float(jnp.max(jnp.abs(out - ref)))
    assert jnp.allclose(out, ref, atol=3e-2, rtol=3e-2), max_err

    print("KERNEL_OK")
</pallas_src>

<mosaic_0001>
module attributes {stable_mosaic.version = 11 : i64} {
  func.func @kernel(%arg0: i32, %arg1: memref<32x8xbf16, #tpu.memory_space<vmem>>, %arg2: memref<16x32xbf16, #tpu.memory_space<vmem>>, %arg3: memref<8x32xbf16, #tpu.memory_space<vmem>>, %arg4: memref<9x32xbf16, #tpu.memory_space<vmem>>, %arg5: memref<16x432xbf16, #tpu.memory_space<vmem>>, %arg6: memref<16x1xf32, #tpu.memory_space<vmem>>, %arg7: memref<16x144xbf16, #tpu.memory_space<vmem>>, %arg8: memref<16x1xf32, #tpu.memory_space<vmem>>, %arg9: memref<16x32xbf16, #tpu.memory_space<vmem>>) attributes {dimension_semantics = [#tpu.dimension_semantics<arbitrary>], iteration_bounds = array<i64: 1>, scalar_prefetch = 0 : i64, scratch_operands = 0 : i64, tpu.core_type = #tpu.core_type<tc>, window_params = [{pipeline_mode = #tpu.pipeline_mode<synchronous>, transform_indices = @transform_0, window_bounds = array<i64: 32, 8>}, {pipeline_mode = #tpu.pipeline_mode<synchronous>, transform_indices = @transform_1, window_bounds = array<i64: 16, 32>}, {pipeline_mode = #tpu.pipeline_mode<synchronous>, transform_indices = @transform_2, window_bounds = array<i64: 8, 32>}, {pipeline_mode = #tpu.pipeline_mode<synchronous>, transform_indices = @transform_3, window_bounds = array<i64: 9, 32>}, {pipeline_mode = #tpu.pipeline_mode<synchronous>, transform_indices = @transform_4, window_bounds = array<i64: 16, 432>}, {pipeline_mode = #tpu.pipeline_mode<synchronous>, transform_indices = @transform_5, window_bounds = array<i64: 16, 1>}, {pipeline_mode = #tpu.pipeline_mode<synchronous>, transform_indices = @transform_6, window_bounds = array<i64: 16, 144>}, {pipeline_mode = #tpu.pipeline_mode<synchronous>, transform_indices = @transform_7, window_bounds = array<i64: 16, 1>}, {pipeline_mode = #tpu.pipeline_mode<synchronous>, transform_indices = @transform_8, window_bounds = array<i64: 16, 32>}]} {
    %c0 = arith.constant 0 : index
    %c0_0 = arith.constant 0 : index
    %0 = vector.load %arg4[%c0, %c0_0] : memref<9x32xbf16, #tpu.memory_space<vmem>>, vector<9x32xbf16>
    %c0_1 = arith.constant 0 : index
    %c0_2 = arith.constant 0 : index
    %1 = vector.load %arg1[%c0_1, %c0_2] : memref<32x8xbf16, #tpu.memory_space<vmem>>, vector<32x8xbf16>
    %c0_3 = arith.constant 0 : index
    %c0_4 = arith.constant 0 : index
    %2 = vector.load %arg3[%c0_3, %c0_4] : memref<8x32xbf16, #tpu.memory_space<vmem>>, vector<8x32xbf16>
    %cst = arith.constant dense<0.000000e+00> : vector<32x32xf32>
    %3 = tpu.matmul %1, %2, %cst {dimension_numbers = #tpu.dot_dimension_numbers<[1], [0], [0], [1], [0, 0, 1, 1], [], []>} : vector<32x8xbf16>, vector<8x32xbf16>, vector<32x32xf32> -> vector<32x32xf32>
    %4 = arith.truncf %3 : vector<32x32xf32> to vector<32x32xbf16>
    %cst_5 = arith.constant 0.000000e+00 : bf16
    %5 = vector.broadcast %cst_5 : bf16 to vector<32x5xbf16>
    %6 = tpu.concatenate %5, %4, %5 in 1 : vector<32x5xbf16>, vector<32x32xbf16>, vector<32x5xbf16> -> vector<32x42xbf16>
    %7 = vector.extract_strided_slice %6 {offsets = [0, 0], sizes = [32, 32], strides = [1, 1]} : vector<32x42xbf16> to vector<32x32xbf16>
    %8 = vector.extract_strided_slice %0 {offsets = [0, 0], sizes = [1, 32], strides = [1, 1]} : vector<9x32xbf16> to vector<1x32xbf16>
    %9 = vector.broadcast %8 : vector<1x32xbf16> to vector<32x32xbf16>
    %10 = arith.mulf %7, %9 : vector<32x32xbf16>
    %11 = vector.extract_strided_slice %6 {offsets = [0, 1], sizes = [32, 32], strides = [1, 1]} : vector<32x42xbf16> to vector<32x32xbf16>
    %12 = vector.extract_strided_slice %0 {offsets = [1, 0], sizes = [1, 32], strides = [1, 1]} : vector<9x32xbf16> to vector<1x32xbf16>
    %13 = vector.broadcast %12 : vector<1x32xbf16> to vector<32x32xbf16>
    %14 = arith.mulf %11, %13 : vector<32x32xbf16>
    %15 = vector.extract_strided_slice %6 {offsets = [0, 2], sizes = [32, 32], strides = [1, 1]} : vector<32x42xbf16> to vector<32x32xbf16>
    %16 = vector.extract_strided_slice %0 {offsets = [2, 0], sizes = [1, 32], strides = [1, 1]} : vector<9x32xbf16> to vector<1x32xbf16>
    %17 = vector.broadcast %16 : vector<1x32xbf16> to vector<32x32xbf16>
    %18 = arith.mulf %15, %17 : vector<32x32xbf16>
    %19 = vector.extract_strided_slice %6 {offsets = [0, 4], sizes = [32, 32], strides = [1, 1]} : vector<32x42xbf16> to vector<32x32xbf16>
    %20 = vector.extract_strided_slice %0 {offsets = [3, 0], sizes = [1, 32], strides = [1, 1]} : vector<9x32xbf16> to vector<1x32xbf16>
    %21 = vector.broadcast %20 : vector<1x32xbf16> to vector<32x32xbf16>
    %22 = arith.mulf %19, %21 : vector<32x32xbf16>
    %23 = vector.extract_strided_slice %6 {offsets = [0, 5], sizes = [32, 32], strides = [1, 1]} : vector<32x42xbf16> to vector<32x32xbf16>
    %24 = vector.extract_strided_slice %6 {offsets = [0, 6], sizes = [32, 32], strides = [1, 1]} : vector<32x42xbf16> to vector<32x32xbf16>
    %25 = vector.extract_strided_slice %0 {offsets = [5, 0], sizes = [1, 32], strides = [1, 1]} : vector<9x32xbf16> to vector<1x32xbf16>
    %26 = vector.broadcast %25 : vector<1x32xbf16> to vector<32x32xbf16>
    %27 = arith.mulf %24, %26 : vector<32x32xbf16>
    %28 = vector.extract_strided_slice %6 {offsets = [0, 8], sizes = [32, 32], strides = [1, 1]} : vector<32x42xbf16> to vector<32x32xbf16>
    %29 = vector.extract_strided_slice %0 {offsets = [6, 0], sizes = [1, 32], strides = [1, 1]} : vector<9x32xbf16> to vector<1x32xbf16>
    %30 = vector.broadcast %29 : vector<1x32xbf16> to vector<32x32xbf16>
    %31 = arith.mulf %28, %30 : vector<32x32xbf16>
    %32 = vector.extract_strided_slice %6 {offsets = [0, 9], sizes = [32, 32], strides = [1, 1]} : vector<32x42xbf16> to vector<32x32xbf16>
    %33 = vector.extract_strided_slice %0 {offsets = [7, 0], sizes = [1, 32], strides = [1, 1]} : vector<9x32xbf16> to vector<1x32xbf16>
    %34 = vector.broadcast %33 : vector<1x32xbf16> to vector<32x32xbf16>
    %35 = arith.mulf %32, %34 : vector<32x32xbf16>
    %36 = vector.extract_strided_slice %6 {offsets = [0, 10], sizes = [32, 32], strides = [1, 1]} : vector<32x42xbf16> to vector<32x32xbf16>
    %37 = vector.extract_strided_slice %0 {offsets = [8, 0], sizes = [1, 32], strides = [1, 1]} : vector<9x32xbf16> to vector<1x32xbf16>
    %38 = vector.broadcast %37 : vector<1x32xbf16> to vector<32x32xbf16>
    %39 = arith.mulf %36, %38 : vector<32x32xbf16>
    %c0_6 = arith.constant 0 : index
    %c0_7 = arith.constant 0 : index
    %40 = vector.load %arg2[%c0_6, %c0_7] : memref<16x32xbf16, #tpu.memory_space<vmem>>, vector<16x32xbf16>
    %cst_8 = arith.constant 0.000000e+00 : bf16
    %41 = vector.broadcast %cst_8 : bf16 to vector<16x5xbf16>
    %42 = tpu.concatenate %41, %40, %41 in 1 : vector<16x5xbf16>, vector<16x32xbf16>, vector<16x5xbf16> -> vector<16x42xbf16>
    %43 = vector.extract_strided_slice %42 {offsets = [0, 0], sizes = [16, 32], strides = [1, 1]} : vector<16x42xbf16> to vector<16x32xbf16>
    %44 = vector.extract_strided_slice %0 {offsets = [0, 0], sizes = [1, 32], strides = [1, 1]} : vector<9x32xbf16> to vector<1x32xbf16>
    %45 = vector.broadcast %44 : vector<1x32xbf16> to vector<16x32xbf16>
    %46 = arith.mulf %43, %45 : vector<16x32xbf16>
    %47 = vector.extract_strided_slice %42 {offsets = [0, 1], sizes = [16, 32], strides = [1, 1]} : vector<16x42xbf16> to vector<16x32xbf16>
    %48 = vector.extract_strided_slice %0 {offsets = [1, 0], sizes = [1, 32], strides = [1, 1]} : vector<9x32xbf16> to vector<1x32xbf16>
    %49 = vector.broadcast %48 : vector<1x32xbf16> to vector<16x32xbf16>
    %50 = arith.mulf %47, %49 : vector<16x32xbf16>
    %51 = vector.extract_strided_slice %42 {offsets = [0, 2], sizes = [16, 32], strides = [1, 1]} : vector<16x42xbf16> to vector<16x32xbf16>
    %52 = vector.extract_strided_slice %0 {offsets = [2, 0], sizes = [1, 32], strides = [1, 1]} : vector<9x32xbf16> to vector<1x32xbf16>
    %53 = vector.broadcast %52 : vector<1x32xbf16> to vector<16x32xbf16>
    %54 = arith.mulf %51, %53 : vector<16x32xbf16>
    %55 = vector.extract_strided_slice %42 {offsets = [0, 4], sizes = [16, 32], strides = [1, 1]} : vector<16x42xbf16> to vector<16x32xbf16>
    %56 = vector.extract_strided_slice %0 {offsets = [3, 0], sizes = [1, 32], strides = [1, 1]} : vector<9x32xbf16> to vector<1x32xbf16>
    %57 = vector.broadcast %56 : vector<1x32xbf16> to vector<16x32xbf16>
    %58 = arith.mulf %55, %57 : vector<16x32xbf16>
    %59 = vector.extract_strided_slice %42 {offsets = [0, 5], sizes = [16, 32], strides = [1, 1]} : vector<16x42xbf16> to vector<16x32xbf16>
    %60 = vector.extract_strided_slice %42 {offsets = [0, 6], sizes = [16, 32], strides = [1, 1]} : vector<16x42xbf16> to vector<16x32xbf16>
    %61 = vector.extract_strided_slice %0 {offsets = [5, 0], sizes = [1, 32], strides = [1, 1]} : vector<9x32xbf16> to vector<1x32xbf16>
    %62 = vector.broadcast %61 : vector<1x32xbf16> to vector<16x32xbf16>
    %63 = arith.mulf %60, %62 : vector<16x32xbf16>
    %64 = vector.extract_strided_slice %42 {offsets = [0, 8], sizes = [16, 32], strides = [1, 1]} : vector<16x42xbf16> to vector<16x32xbf16>
    %65 = vector.extract_strided_slice %0 {offsets = [6, 0], sizes = [1, 32], strides = [1, 1]} : vector<9x32xbf16> to vector<1x32xbf16>
    %66 = vector.broadcast %65 : vector<1x32xbf16> to vector<16x32xbf16>
    %67 = arith.mulf %64, %66 : vector<16x32xbf16>
    %68 = vector.extract_strided_slice %42 {offsets = [0, 9], sizes = [16, 32], strides = [1, 1]} : vector<16x42xbf16> to vector<16x32xbf16>
    %69 = vector.extract_strided_slice %0 {offsets = [7, 0], sizes = [1, 32], strides = [1, 1]} : vector<9x32xbf16> to vector<1x32xbf16>
    %70 = vector.broadcast %69 : vector<1x32xbf16> to vector<16x32xbf16>
    %71 = arith.mulf %68, %70 : vector<16x32xbf16>
    %72 = vector.extract_strided_slice %42 {offsets = [0, 10], sizes = [16, 32], strides = [1, 1]} : vector<16x42xbf16> to vector<16x32xbf16>
    %73 = vector.extract_strided_slice %0 {offsets = [8, 0], sizes = [1, 32], strides = [1, 1]} : vector<9x32xbf16> to vector<1x32xbf16>
    %74 = vector.broadcast %73 : vector<1x32xbf16> to vector<16x32xbf16>
    %75 = arith.mulf %72, %74 : vector<16x32xbf16>
    %76 = tpu.concatenate %10, %14, %18, %22, %23, %27, %31, %35, %39, %46, %50, %54, %58, %59, %63, %67 in 0 : vector<32x32xbf16>, vector<32x32xbf16>, vector<32x32xbf16>, vector<32x32xbf16>, vector<32x32xbf16>, vector<32x32xbf16>, vector<32x32xbf16>, vector<32x32xbf16>, vector<32x32xbf16>, vector<16x32xbf16>, vector<16x32xbf16>, vector<16x32xbf16>, vector<16x32xbf16>, vector<16x32xbf16>, vector<16x32xbf16>, vector<16x32xbf16> -> vector<400x32xbf16>
    %77 = tpu.concatenate %71, %75 in 0 : vector<16x32xbf16>, vector<16x32xbf16> -> vector<32x32xbf16>
    %78 = tpu.concatenate %76, %77 in 0 : vector<400x32xbf16>, vector<32x32xbf16> -> vector<432x32xbf16>
    %c0_9 = arith.constant 0 : index
    %c0_10 = arith.constant 0 : index
    %79 = vector.load %arg5[%c0_9, %c0_10] : memref<16x432xbf16, #tpu.memory_space<vmem>>, vector<16x432xbf16>
    %cst_11 = arith.constant dense<0.000000e+00> : vector<16x32xf32>
    %80 = tpu.matmul %79, %78, %cst_11 {dimension_numbers = #tpu.dot_dimension_numbers<[1], [0], [0], [1], [0, 0, 1, 1], [], []>} : vector<16x432xbf16>, vector<432x32xbf16>, vector<16x32xf32> -> vector<16x32xf32>
    %c0_12 = arith.constant 0 : index
    %c0_13 = arith.constant 0 : index
    %81 = vector.load %arg6[%c0_12, %c0_13] : memref<16x1xf32, #tpu.memory_space<vmem>>, vector<16x1xf32>
    %82 = vector.broadcast %81 : vector<16x1xf32> to vector<16x32xf32>
    %83 = arith.addf %80, %82 : vector<16x32xf32>
    %cst_14 = arith.constant 0.000000e+00 : f32
    %84 = vector.broadcast %cst_14 : f32 to vector<16x32xf32>
    %85 = arith.maximumf %83, %84 : vector<16x32xf32>
    %86 = arith.truncf %85 : vector<16x32xf32> to vector<16x32xbf16>
    %cst_15 = arith.constant 0.000000e+00 : bf16
    %87 = vector.broadcast %cst_15 : bf16 to vector<16x5xbf16>
    %88 = tpu.concatenate %87, %86, %87 in 1 : vector<16x5xbf16>, vector<16x32xbf16>, vector<16x5xbf16> -> vector<16x42xbf16>
    %89 = vector.extract_strided_slice %88 {offsets = [0, 0], sizes = [16, 32], strides = [1, 1]} : vector<16x42xbf16> to vector<16x32xbf16>
    %90 = vector.extract_strided_slice %0 {offsets = [0, 0], sizes = [1, 32], strides = [1, 1]} : vector<9x32xbf16> to vector<1x32xbf16>
    %91 = vector.broadcast %90 : vector<1x32xbf16> to vector<16x32xbf16>
    %92 = arith.mulf %89, %91 : vector<16x32xbf16>
    %93 = vector.extract_strided_slice %88 {offsets = [0, 1], sizes = [16, 32], strides = [1, 1]} : vector<16x42xbf16> to vector<16x32xbf16>
    %94 = vector.extract_strided_slice %0 {offsets = [1, 0], sizes = [1, 32], strides = [1, 1]} : vector<9x32xbf16> to vector<1x32xbf16>
    %95 = vector.broadcast %94 : vector<1x32xbf16> to vector<16x32xbf16>
    %96 = arith.mulf %93, %95 : vector<16x32xbf16>
    %97 = vector.extract_strided_slice %88 {offsets = [0, 2], sizes = [16, 32], strides = [1, 1]} : vector<16x42xbf16> to vector<16x32xbf16>
    %98 = vector.extract_strided_slice %0 {offsets = [2, 0], sizes = [1, 32], strides = [1, 1]} : vector<9x32xbf16> to vector<1x32xbf16>
    %99 = vector.broadcast %98 : vector<1x32xbf16> to vector<16x32xbf16>
    %100 = arith.mulf %97, %99 : vector<16x32xbf16>
    %101 = vector.extract_strided_slice %88 {offsets = [0, 4], sizes = [16, 32], strides = [1, 1]} : vector<16x42xbf16> to vector<16x32xbf16>
    %102 = vector.extract_strided_slice %0 {offsets = [3, 0], sizes = [1, 32], strides = [1, 1]} : vector<9x32xbf16> to vector<1x32xbf16>
    %103 = vector.broadcast %102 : vector<1x32xbf16> to vector<16x32xbf16>
    %104 = arith.mulf %101, %103 : vector<16x32xbf16>
    %105 = vector.extract_strided_slice %88 {offsets = [0, 5], sizes = [16, 32], strides = [1, 1]} : vector<16x42xbf16> to vector<16x32xbf16>
    %106 = vector.extract_strided_slice %88 {offsets = [0, 6], sizes = [16, 32], strides = [1, 1]} : vector<16x42xbf16> to vector<16x32xbf16>
    %107 = vector.extract_strided_slice %0 {offsets = [5, 0], sizes = [1, 32], strides = [1, 1]} : vector<9x32xbf16> to vector<1x32xbf16>
    %108 = vector.broadcast %107 : vector<1x32xbf16> to vector<16x32xbf16>
    %109 = arith.mulf %106, %108 : vector<16x32xbf16>
    %110 = vector.extract_strided_slice %88 {offsets = [0, 8], sizes = [16, 32], strides = [1, 1]} : vector<16x42xbf16> to vector<16x32xbf16>
    %111 = vector.extract_strided_slice %0 {offsets = [6, 0], sizes = [1, 32], strides = [1, 1]} : vector<9x32xbf16> to vector<1x32xbf16>
    %112 = vector.broadcast %111 : vector<1x32xbf16> to vector<16x32xbf16>
    %113 = arith.mulf %110, %112 : vector<16x32xbf16>
    %114 = vector.extract_strided_slice %88 {offsets = [0, 9], sizes = [16, 32], strides = [1, 1]} : vector<16x42xbf16> to vector<16x32xbf16>
    %115 = vector.extract_strided_slice %0 {offsets = [7, 0], sizes = [1, 32], strides = [1, 1]} : vector<9x32xbf16> to vector<1x32xbf16>
    %116 = vector.broadcast %115 : vector<1x32xbf16> to vector<16x32xbf16>
    %117 = arith.mulf %114, %116 : vector<16x32xbf16>
    %118 = vector.extract_strided_slice %88 {offsets = [0, 10], sizes = [16, 32], strides = [1, 1]} : vector<16x42xbf16> to vector<16x32xbf16>
    %119 = vector.extract_strided_slice %0 {offsets = [8, 0], sizes = [1, 32], strides = [1, 1]} : vector<9x32xbf16> to vector<1x32xbf16>
    %120 = vector.broadcast %119 : vector<1x32xbf16> to vector<16x32xbf16>
    %121 = arith.mulf %118, %120 : vector<16x32xbf16>
    %122 = tpu.concatenate %92, %96, %100, %104, %105, %109, %113, %117, %121 in 0 : vector<16x32xbf16>, vector<16x32xbf16>, vector<16x32xbf16>, vector<16x32xbf16>, vector<16x32xbf16>, vector<16x32xbf16>, vector<16x32xbf16>, vector<16x32xbf16>, vector<16x32xbf16> -> vector<144x32xbf16>
    %c0_16 = arith.constant 0 : index
    %c0_17 = arith.constant 0 : index
    %123 = vector.load %arg7[%c0_16, %c0_17] : memref<16x144xbf16, #tpu.memory_space<vmem>>, vector<16x144xbf16>
    %cst_18 = arith.constant dense<0.000000e+00> : vector<16x32xf32>
    %124 = tpu.matmul %123, %122, %cst_18 {dimension_numbers = #tpu.dot_dimension_numbers<[1], [0], [0], [1], [0, 0, 1, 1], [], []>} : vector<16x144xbf16>, vector<144x32xbf16>, vector<16x32xf32> -> vector<16x32xf32>
    %c0_19 = arith.constant 0 : index
    %c0_20 = arith.constant 0 : index
    %125 = vector.load %arg8[%c0_19, %c0_20] : memref<16x1xf32, #tpu.memory_space<vmem>>, vector<16x1xf32>
    %126 = vector.broadcast %125 : vector<16x1xf32> to vector<16x32xf32>
    %127 = arith.addf %124, %126 : vector<16x32xf32>
    %cst_21 = arith.constant 0.000000e+00 : f32
    %128 = vector.broadcast %cst_21 : f32 to vector<16x32xf32>
    %129 = arith.maximumf %127, %128 : vector<16x32xf32>
    %130 = arith.truncf %129 : vector<16x32xf32> to vector<16x32xbf16>
    %c0_22 = arith.constant 0 : index
    %c0_23 = arith.constant 0 : index
    %131 = vector.load %arg9[%c0_22, %c0_23] : memref<16x32xbf16, #tpu.memory_space<vmem>>, vector<16x32xbf16>
    tpu.vector_store %arg9[%c0_22, %c0_23], %130 {strides = array<i32>} : memref<16x32xbf16, #tpu.memory_space<vmem>>, vector<16x32xbf16>,
    return
  }
  func.func @transform_0(%arg0: i32) -> (i32, i32) {
    %c0_i32 = arith.constant 0 : i32
    %c0_i32_0 = arith.constant 0 : i32
    %c0_i32_1 = arith.constant 0 : i32
    return %c0_i32, %c0_i32_0 : i32, i32
  }
  func.func @transform_1(%arg0: i32) -> (i32, i32) {
    %c0_i32 = arith.constant 0 : i32
    %c0_i32_0 = arith.constant 0 : i32
    %c0_i32_1 = arith.constant 0 : i32
    return %c0_i32, %c0_i32_0 : i32, i32
  }
  func.func @transform_2(%arg0: i32) -> (i32, i32) {
    %c0_i32 = arith.constant 0 : i32
    %c0_i32_0 = arith.constant 0 : i32
    %c0_i32_1 = arith.constant 0 : i32
    return %c0_i32, %c0_i32_0 : i32, i32
  }
  func.func @transform_3(%arg0: i32) -> (i32, i32) {
    %c0_i32 = arith.constant 0 : i32
    %c0_i32_0 = arith.constant 0 : i32
    %c0_i32_1 = arith.constant 0 : i32
    return %c0_i32, %c0_i32_0 : i32, i32
  }
  func.func @transform_4(%arg0: i32) -> (i32, i32) {
    %c0_i32 = arith.constant 0 : i32
    %c0_i32_0 = arith.constant 0 : i32
    %c0_i32_1 = arith.constant 0 : i32
    return %c0_i32, %c0_i32_0 : i32, i32
  }
  func.func @transform_5(%arg0: i32) -> (i32, i32) {
    %c0_i32 = arith.constant 0 : i32
    %c0_i32_0 = arith.constant 0 : i32
    %c0_i32_1 = arith.constant 0 : i32
    return %c0_i32, %c0_i32_0 : i32, i32
  }
  func.func @transform_6(%arg0: i32) -> (i32, i32) {
    %c0_i32 = arith.constant 0 : i32
    %c0_i32_0 = arith.constant 0 : i32
    %c0_i32_1 = arith.constant 0 : i32
    return %c0_i32, %c0_i32_0 : i32, i32
  }
  func.func @transform_7(%arg0: i32) -> (i32, i32) {
    %c0_i32 = arith.constant 0 : i32
    %c0_i32_0 = arith.constant 0 : i32
    %c0_i32_1 = arith.constant 0 : i32
    return %c0_i32, %c0_i32_0 : i32, i32
  }
  func.func @transform_8(%arg0: i32) -> (i32, i32) {
    %c0_i32 = arith.constant 0 : i32
    %c0_i32_0 = arith.constant 0 : i32
    %c0_i32_1 = arith.constant 0 : i32
    return %c0_i32, %c0_i32_0 : i32, i32
  }
}

</mosaic_0001>

<llo_original>
// kernel: tpu_custom_call.1
$region0: #{tpu_custom_call.1}
  #allocation0 [shape = 'u32[]', space=smem, size = 0x4, offset = 0x4, fixed_abs, tag = 'smem constant byte address 0x4 - core index']
  #allocation1 [shape = 'u32[144,128]{1,0:T(1,128)}', space=vmem, size = 0x12000, scoped, tag = 'internal scratch']
  %s0 = inlined_call_operand.vmem [shape: bf16[32,8], index: 0, kind: input, shape index: {}]
  %s1 = inlined_call_operand.vmem [shape: bf16[16,32], index: 1, kind: input, shape index: {}]
  %s2 = inlined_call_operand.hbm [shape: bf16[8,32], index: 2, kind: input, shape index: {}]
  %s3 = inlined_call_operand.vmem [shape: bf16[9,32], index: 3, kind: input, shape index: {}]
  %s4 = inlined_call_operand.vmem [shape: bf16[16,432], index: 4, kind: input, shape index: {}]
  %s5 = inlined_call_operand.vmem [shape: f32[16,1], index: 5, kind: input, shape index: {}]
  %s6 = inlined_call_operand.vmem [shape: bf16[16,144], index: 6, kind: input, shape index: {}]
  %s7 = inlined_call_operand.vmem [shape: f32[16,1], index: 7, kind: input, shape index: {}]
  %s8 = inlined_call_operand.hbm [shape: bf16[16,32], index: 8, kind: output, shape index: {}]
  %s9 = sld [smem:[#allocation0]]
  $region46: #{tpu_custom_call.1} parent=0
    _
  %s11 = ssub.s32 1, %s9
  %s12 = scalar_select 0, %s11, %s9
  $region1: #{tpu_custom_call.1} parent=0
    #allocation2 [shape = 'u8[2048]{0}', space=vmem, size = 0x800, scoped, tag = 'input window, operand 2, single buffered']
    #allocation3 [shape = 's32[1]{0}', space=sflag, size = 0x4, scoped, tag = 'scoped memory for tpu_custom_call.1']
    #allocation4 [shape = 's32[1]{0}', space=sflag, size = 0x4, scoped, tag = 'scoped memory for tpu_custom_call.1']
    #allocation5 [shape = 'u8[4096]{0}', space=vmem, size = 0x1000, scoped, tag = 'output window, operand 0, single buffered']
    %13 = vsyncpa [#allocation3], 0
    %14 = vsyncpa [#allocation4], 0
    // Predicated region
    $region2: #{tpu_custom_call.1} parent=1 // pred_check
      _
    $region3: #{tpu_custom_call.1} parent=1 // pred_check_branch
      %16 = sbr.rel (0) target = $region5
    $region4: #{tpu_custom_call.1} parent=1 // pred_region
      _
    $region5: #{tpu_custom_call.1} parent=1 // pred_fallthru
      _
    // Predicated region
    $region6: #{tpu_custom_call.1} parent=1 // pred_check
      _
    $region7: #{tpu_custom_call.1} parent=1 // pred_check_branch
      %18 = sbr.rel (0) target = $region9
    $region8: #{tpu_custom_call.1} parent=1 // pred_region
      _
    $region9: #{tpu_custom_call.1} parent=1 // pred_fallthru
      _
    // Predicated region
    $region10: #{tpu_custom_call.1} parent=1 // pred_check
      _
    $region11: #{tpu_custom_call.1} parent=1 // pred_check_branch
      %20 = sbr.rel (0) target = $region13
    $region12: #{tpu_custom_call.1} parent=1 // pred_region
      %s22 = ssub.s32 64, 64
      %23 = vsyncadd [#allocation3], %s22
      %s25 = sshll.u32 [#allocation2], 4
      %s26 = int_to_ptr.vmem [resolvable:$true] %s25
      %28 = dma.hbm_to_vmem [thread:$0]  %s2, 64, %s26, [#allocation3]
    $region13: #{tpu_custom_call.1} parent=1 // pred_fallthru
      _
    // Predicated region
    $region14: #{tpu_custom_call.1} parent=1 // pred_check
      _
    $region15: #{tpu_custom_call.1} parent=1 // pred_check_branch
      %30 = sbr.rel (0) target = $region17
    $region16: #{tpu_custom_call.1} parent=1 // pred_region
      _
    $region17: #{tpu_custom_call.1} parent=1 // pred_fallthru
      _
    // Predicated region
    $region18: #{tpu_custom_call.1} parent=1 // pred_check
      _
    $region19: #{tpu_custom_call.1} parent=1 // pred_check_branch
      %32 = sbr.rel (0) target = $region21
    $region20: #{tpu_custom_call.1} parent=1 // pred_region
      _
    $region21: #{tpu_custom_call.1} parent=1 // pred_fallthru
      _
    // Predicated region
    $region22: #{tpu_custom_call.1} parent=1 // pred_check
      _
    $region23: #{tpu_custom_call.1} parent=1 // pred_check_branch
      %34 = sbr.rel (0) target = $region25
    $region24: #{tpu_custom_call.1} parent=1 // pred_region
      _
    $region25: #{tpu_custom_call.1} parent=1 // pred_fallthru
      _
    // Predicated region
    $region26: #{tpu_custom_call.1} parent=1 // pred_check
      _
    $region27: #{tpu_custom_call.1} parent=1 // pred_check_branch
      %36 = sbr.rel (0) target = $region29
    $region28: #{tpu_custom_call.1} parent=1 // pred_region
      _
    $region29: #{tpu_custom_call.1} parent=1 // pred_fallthru
      _
    // Predicated region
    $region30: #{tpu_custom_call.1} parent=1 // pred_check
      _
    $region31: #{tpu_custom_call.1} parent=1 // pred_check_branch
      %38 = sbr.rel (0) target = $region33
    $region32: #{tpu_custom_call.1} parent=1 // pred_region
      _
    $region33: #{tpu_custom_call.1} parent=1 // pred_fallthru
      _
    // Predicated region
    $region34: #{tpu_custom_call.1} parent=1 // pred_check
      _
    $region35: #{tpu_custom_call.1} parent=1 // pred_check_branch
      %40 = sbr.rel (0) target = $region37
    $region36: #{tpu_custom_call.1} parent=1 // pred_region
      %41 = dma.done [#allocation3], 64
    $region37: #{tpu_custom_call.1} parent=1 // pred_fallthru
      _
    %v43 = vld [vmem:[%s3] sm:$0xf]
    %v44 = vld [vmem:[%s3 + $0x4] sm:$0x1]
    %v45 = vld [vmem:[%s0] sm:$0xf]
    %v46 = vld [vmem:[%s0 + $0x4] sm:$0xf]
    %v47 = vld [vmem:[%s0 + $0x8] sm:$0xf]
    %v48 = vld [vmem:[%s0 + $0xc] sm:$0xf]
    %v49 = vld [vmem:[#allocation2] sm:$0xf]
    %v54 = vunpack.c.l.b16 %v45
    %v55 = vunpack.c.l.b16 %v46
    %v56 = vunpack.c.l.b16 %v47
    %v57 = vunpack.c.l.b16 %v48
    %v58 = vpack.c.b16 %v55, %v54
    %v59 = vpack.c.b16 %v57, %v56
    %vm60 = vcmask 64512
    %v62 = vsel %vm60, %v58, 0
    %v65 = vsel %vm60, %v59, 0
    %vm67 = vcmask 1043456
    %v69 = vsel %vm67, %v49, 0
    %71 = vmatprep.subr.bf16.mxu0 0
    %72 = vmatpush1.bf16.msra.mxu0 %v69
    %73 = vmatprep.subr.bf16.mxu0 0
    %74 = vmatpush1.bf16.msra.mxu0 0
    %75 = vmatprep.subr.bf16.mxu0 0
    %76 = vmatpush1.bf16.msra.mxu0 0
    %77 = vmatprep.subr.bf16.mxu0 0
    %78 = vmatpush1.bf16.msra.mxu0 0
    %79 = vmatprep.subr.bf16.mxu0 0
    %80 = vmatpush1.bf16.msra.mxu0 0
    %81 = vmatprep.subr.bf16.mxu0 0
    %82 = vmatpush1.bf16.msra.mxu0 0
    %83 = vmatprep.subr.bf16.mxu0 0
    %84 = vmatpush1.bf16.msra.mxu0 0
    %85 = vmatprep.subr.bf16.mxu0 0
    %86 = vmatpush1.bf16.msra.mxu0 0
    %87 = vmatprep.subr.bf16.mxu0 0
    %88 = vmatpush1.bf16.msra.mxu0 0
    %89 = vmatprep.subr.bf16.mxu0 0
    %90 = vmatpush1.bf16.msra.mxu0 0
    %91 = vmatprep.subr.bf16.mxu0 0
    %92 = vmatpush1.bf16.msra.mxu0 0
    %93 = vmatprep.subr.bf16.mxu0 0
    %94 = vmatpush1.bf16.msra.mxu0 0
    %95 = vmatprep.subr.bf16.mxu0 0
    %96 = vmatpush1.bf16.msra.mxu0 0
    %97 = vmatprep.subr.bf16.mxu0 0
    %98 = vmatpush1.bf16.msra.mxu0 0
    %99 = vmatprep.subr.bf16.mxu0 0
    %100 = vmatpush1.bf16.msra.mxu0 0
    %101 = vmatprep.subr.bf16.mxu0 0
    %102 = vmatpush1.bf16.msra.mxu0 0
    %103 = vmatprep.mubr.bf16.mxu0 0
    %104 = vmatmul.mubr.bf16.gmra.mrb[0].mxu0 %v62
    %v105 = vpop.f32.mrb[0].mxu0
    %v106 = vadd.f32 0.0, %v105
    %v107 = vpop.f32.mrb[0].mxu0
    %v108 = vpop.f32.mrb[0].mxu0
    %v109 = vadd.f32 0.0, %v108
    %v110 = vpop.f32.mrb[0].mxu0
    %111 = vmatprep.mubr.bf16.mxu0 0
    %112 = vmatmul.mubr.bf16.gmra.mrb[0].mxu0 %v65
    %v113 = vpop.f32.mrb[0].mxu0
    %v114 = vadd.f32 0.0, %v113
    %v115 = vpop.f32.mrb[0].mxu0
    %v116 = vpop.f32.mrb[0].mxu0
    %v117 = vadd.f32 0.0, %v116
    %v118 = vpop.f32.mrb[0].mxu0
    %119 = vdwg.mxu0
    %v120 = vpack.c.bf16 %v109, %v106
    %v121 = vpack.c.bf16 %v117, %v114
    %124 = vrot.lane.b32.xlu0 %v120, 5
    %v125 = vpop.permute.xlu0 %124
    %126 = vrot.lane.b32.xlu0 %v121, 5
    %v127 = vpop.permute.xlu0 %126
    %vm128 = vcmask 39936
    %v131 = vsel %vm128, 0, %v125
    %v133 = vsel %vm128, 0, %v127
    %vm134 = vcmask 302080
    %v135 = vsel %vm134, %v131, 0
    %v137 = vsel %vm134, %v133, 0
    %v140 = vpack.i.b16 %v43, %v43
    %v142 = vlaneseq
    %v143 = vshrl.u32 %v142, 7
    %v144 = vsub.s32 0, %v143
    %v145 = vrot.slane %v140, %v144
    %v146 = vmul.bf16 %v135, %v145
    %v147 = vmul.bf16 %v137, %v145
    %v148 = vshrl.u32 %v43, 16
    %v149 = vpack.i.b16 %v148, %v148
    %v151 = vlaneseq
    %v152 = vshrl.u32 %v151, 7
    %v153 = vsub.s32 0, %v152
    %v154 = vrot.slane %v149, %v153
    %156 = vrot.lane.b32.xlu0 %v154, 1
    %v157 = vpop.permute.xlu0 %156
    %v159 = vmul.bf16 %v135, %v157
    %v160 = vmul.bf16 %v137, %v157
    %v161 = vlaneseq
    %v162 = vshrl.u32 %v161, 7
    %v163 = vsub.s32 1, %v162
    %v164 = vrot.slane %v140, %v163
    %166 = vrot.lane.b32.xlu0 %v164, 2
    %v167 = vpop.permute.xlu0 %166
    %v169 = vmul.bf16 %v135, %v167
    %v170 = vmul.bf16 %v137, %v167
    %v171 = vlaneseq
    %v172 = vshrl.u32 %v171, 7
    %v173 = vsub.s32 1, %v172
    %v174 = vrot.slane %v149, %v173
    %176 = vrot.lane.b32.xlu0 %v174, 4
    %v177 = vpop.permute.xlu0 %176
    %v179 = vmul.bf16 %v135, %v177
    %v180 = vmul.bf16 %v137, %v177
    %v181 = vlaneseq
    %v182 = vshrl.u32 %v181, 7
    %v183 = vsub.s32 2, %v182
    %v184 = vrot.slane %v149, %v183
    %186 = vrot.lane.b32.xlu0 %v184, 6
    %v187 = vpop.permute.xlu0 %186
    %v189 = vmul.bf16 %v135, %v187
    %v190 = vmul.bf16 %v137, %v187
    %v191 = vlaneseq
    %v192 = vshrl.u32 %v191, 7
    %v193 = vsub.s32 3, %v192
    %v194 = vrot.slane %v140, %v193
    %196 = vrot.lane.b32.xlu0 %v194, 8
    %v197 = vpop.permute.xlu0 %196
    %v199 = vmul.bf16 %v135, %v197
    %v200 = vmul.bf16 %v137, %v197
    %v201 = vlaneseq
    %v202 = vshrl.u32 %v201, 7
    %v203 = vsub.s32 3, %v202
    %v204 = vrot.slane %v149, %v203
    %206 = vrot.lane.b32.xlu0 %v204, 9
    %v207 = vpop.permute.xlu0 %206
    %v209 = vmul.bf16 %v135, %v207
    %v210 = vmul.bf16 %v137, %v207
    %v212 = vpack.i.b16 %v44, %v44
    %v214 = vlaneseq
    %v215 = vshrl.u32 %v214, 7
    %v216 = vsub.s32 0, %v215
    %v217 = vrot.slane %v212, %v216
    %219 = vrot.lane.b32.xlu0 %v217, 10
    %v220 = vpop.permute.xlu0 %219
    %v222 = vmul.bf16 %v135, %v220
    %v223 = vmul.bf16 %v137, %v220
    %v224 = vld [vmem:[%s1] sm:$0xf]
    %v225 = vld [vmem:[%s1 + $0x4] sm:$0xf]
    %v228 = vunpack.c.l.b16 %v224
    %v229 = vunpack.c.l.b16 %v225
    %v230 = vpack.c.b16 %v229, %v228
    %231 = vrot.lane.b32.xlu0 %v230, 5
    %v232 = vpop.permute.xlu0 %231
    %v234 = vsel %vm128, 0, %v232
    %v235 = vsel %vm134, %v234, 0
    %v237 = vmul.bf16 %v235, %v145
    %v238 = vmul.bf16 %v235, %v157
    %v239 = vmul.bf16 %v235, %v167
    %v240 = vmul.bf16 %v235, %v177
    %v241 = vmul.bf16 %v235, %v187
    %v242 = vmul.bf16 %v235, %v197
    %v243 = vmul.bf16 %v235, %v207
    %v244 = vmul.bf16 %v235, %v220
    %247 = vrot.lane.b32.xlu0 %v159, 127
    %v248 = vpop.permute.xlu0 %247
    %249 = vrot.lane.b32.xlu0 %v160, 127
    %v250 = vpop.permute.xlu0 %249
    %255 = vrot.lane.b32.xlu0 %v169, 126
    %v256 = vpop.permute.xlu0 %255
    %257 = vrot.lane.b32.xlu0 %v170, 126
    %v258 = vpop.permute.xlu0 %257
    %263 = vrot.lane.b32.xlu0 %v179, 124
    %v264 = vpop.permute.xlu0 %263
    %265 = vrot.lane.b32.xlu0 %v180, 124
    %v266 = vpop.permute.xlu0 %265
    %271 = vrot.lane.b32.xlu0 %v135, 123
    %v272 = vpop.permute.xlu0 %271
    %273 = vrot.lane.b32.xlu0 %v137, 123
    %v274 = vpop.permute.xlu0 %273
    %279 = vrot.lane.b32.xlu0 %v189, 122
    %v280 = vpop.permute.xlu0 %279
    %281 = vrot.lane.b32.xlu0 %v190, 122
    %v282 = vpop.permute.xlu0 %281
    %287 = vrot.lane.b32.xlu0 %v199, 120
    %v288 = vpop.permute.xlu0 %287
    %289 = vrot.lane.b32.xlu0 %v200, 120
    %v290 = vpop.permute.xlu0 %289
    %295 = vrot.lane.b32.xlu0 %v209, 119
    %v296 = vpop.permute.xlu0 %295
    %297 = vrot.lane.b32.xlu0 %v210, 119
    %v298 = vpop.permute.xlu0 %297
    %303 = vrot.lane.b32.xlu0 %v222, 118
    %v304 = vpop.permute.xlu0 %303
    %305 = vrot.lane.b32.xlu0 %v223, 118
    %v306 = vpop.permute.xlu0 %305
    %310 = vrot.lane.b32.xlu0 %v238, 127
    %v311 = vpop.permute.xlu0 %310
    %314 = vrot.lane.b32.xlu0 %v239, 126
    %v315 = vpop.permute.xlu0 %314
    %318 = vrot.lane.b32.xlu0 %v240, 124
    %v319 = vpop.permute.xlu0 %318
    %322 = vrot.lane.b32.xlu0 %v235, 123
    %v323 = vpop.permute.xlu0 %322
    %326 = vrot.lane.b32.xlu0 %v241, 122
    %v327 = vpop.permute.xlu0 %326
    %330 = vrot.lane.b32.xlu0 %v242, 120
    %v331 = vpop.permute.xlu0 %330
    %334 = vrot.lane.b32.xlu0 %v244, 127
    %v335 = vpop.permute.xlu0 %334
    %337 = vrot.lane.b32.xlu0 %v243, 119
    %v338 = vpop.permute.xlu0 %337
    %339 = vrot.lane.b32.xlu0 %v335, 119
    %v340 = vpop.permute.xlu0 %339
    %v343 = vld [vmem:[%s4] sm:$0xff]
    %v344 = vld [vmem:[%s4 + $0x8] sm:$0xff]
    %v345 = vld [vmem:[%s4 + $0x10] sm:$0xff]
    %v346 = vld [vmem:[%s4 + $0x18] sm:$0xff]
    %v347 = vld [vmem:[%s5] sm:$0xff]
    %v348 = vld [vmem:[%s5 + $0x8] sm:$0xff]
    %350 = vset.pattern.permute.xlu0 0
    %351 = vperm.xlu0 %350, %v347
    %v352 = vpop.permute.xlu0 %351
    %355 = vset.pattern.permute.xlu0 0
    %356 = vperm.xlu0 %355, %v348
    %v357 = vpop.permute.xlu0 %356
    %v363 = vunpack.c.l.b16 %v343
    %v364 = vunpack.c.h.b16 %v343
    %v365 = vunpack.c.l.b16 %v344
    %v366 = vunpack.c.h.b16 %v344
    %v367 = vunpack.c.l.b16 %v345
    %v368 = vunpack.c.h.b16 %v345
    %v369 = vunpack.c.l.b16 %v346
    %v370 = vunpack.c.h.b16 %v346
    %v371 = vpack.c.b16 %v367, %v363
    %v372 = vpack.c.b16 %v368, %v364
    %v373 = vpack.c.b16 %v369, %v365
    %v374 = vpack.c.b16 %v370, %v366
    %vm378 = vcmask 392192
    %v380 = vsel %vm378, %v374, 0
    %382 = vmatprep.subr.bf16.mxu0 0
    %383 = vmatpush1.bf16.msra.mxu0 %v146
    %384 = vmatprep.subr.bf16.mxu0 0
    %385 = vmatpush1.bf16.msra.mxu0 %v147
    %386 = vmatprep.subr.bf16.mxu0 0
    %387 = vmatpush1.bf16.msra.mxu0 %v248
    %388 = vmatprep.subr.bf16.mxu0 0
    %389 = vmatpush1.bf16.msra.mxu0 %v250
    %390 = vmatprep.subr.bf16.mxu0 0
    %391 = vmatpush1.bf16.msra.mxu0 %v256
    %392 = vmatprep.subr.bf16.mxu0 0
    %393 = vmatpush1.bf16.msra.mxu0 %v258
    %394 = vmatprep.subr.bf16.mxu0 0
    %395 = vmatpush1.bf16.msra.mxu0 %v264
    %396 = vmatprep.subr.bf16.mxu0 0
    %397 = vmatpush1.bf16.msra.mxu0 %v266
    %398 = vmatprep.subr.bf16.mxu0 0
    %399 = vmatpush1.bf16.msra.mxu0 %v272
    %400 = vmatprep.subr.bf16.mxu0 0
    %401 = vmatpush1.bf16.msra.mxu0 %v274
    %402 = vmatprep.subr.bf16.mxu0 0
    %403 = vmatpush1.bf16.msra.mxu0 %v280
    %404 = vmatprep.subr.bf16.mxu0 0
    %405 = vmatpush1.bf16.msra.mxu0 %v282
    %406 = vmatprep.subr.bf16.mxu0 0
    %407 = vmatpush1.bf16.msra.mxu0 %v288
    %408 = vmatprep.subr.bf16.mxu0 0
    %409 = vmatpush1.bf16.msra.mxu0 %v290
    %410 = vmatprep.subr.bf16.mxu0 0
    %411 = vmatpush1.bf16.msra.mxu0 %v296
    %412 = vmatprep.subr.bf16.mxu0 0
    %413 = vmatpush1.bf16.msra.mxu0 %v298
    %414 = vmatprep.mubr.bf16.mxu0 %v372
    %415 = vmatmul.mubr.bf16.gmra.mrb[0].mxu0 %v371
    %v416 = vpop.f32.mrb[0].mxu0
    %v417 = vadd.f32 %v352, %v416
    %v418 = vpop.f32.mrb[0].mxu0
    %v419 = vpop.f32.mrb[0].mxu0
    %v420 = vadd.f32 %v357, %v419
    %v421 = vpop.f32.mrb[0].mxu0
    %422 = vdwg.mxu0
    %423 = vmatprep.subr.bf16.mxu0 0
    %424 = vmatpush1.bf16.msra.mxu0 %v304
    %425 = vmatprep.subr.bf16.mxu0 0
    %426 = vmatpush1.bf16.msra.mxu0 %v306
    %427 = vmatprep.subr.bf16.mxu0 0
    %428 = vmatpush1.bf16.msra.mxu0 %v237
    %429 = vmatprep.subr.bf16.mxu0 0
    %430 = vmatpush1.bf16.msra.mxu0 %v311
    %431 = vmatprep.subr.bf16.mxu0 0
    %432 = vmatpush1.bf16.msra.mxu0 %v315
    %433 = vmatprep.subr.bf16.mxu0 0
    %434 = vmatpush1.bf16.msra.mxu0 %v319
    %435 = vmatprep.subr.bf16.mxu0 0
    %436 = vmatpush1.bf16.msra.mxu0 %v323
    %437 = vmatprep.subr.bf16.mxu0 0
    %438 = vmatpush1.bf16.msra.mxu0 %v327
    %439 = vmatprep.subr.bf16.mxu0 0
    %440 = vmatpush1.bf16.msra.mxu0 %v331
    %441 = vmatprep.subr.bf16.mxu0 0
    %442 = vmatpush1.bf16.msra.mxu0 %v338
    %443 = vmatprep.subr.bf16.mxu0 0
    %444 = vmatpush1.bf16.msra.mxu0 %v340
    %445 = vmatprep.subr.bf16.mxu0 0
    %446 = vmatpush1.bf16.msra.mxu0 0
    %447 = vmatprep.subr.bf16.mxu0 0
    %448 = vmatpush1.bf16.msra.mxu0 0
    %449 = vmatprep.subr.bf16.mxu0 0
    %450 = vmatpush1.bf16.msra.mxu0 0
    %451 = vmatprep.subr.bf16.mxu0 0
    %452 = vmatpush1.bf16.msra.mxu0 0
    %453 = vmatprep.subr.bf16.mxu0 0
    %454 = vmatpush1.bf16.msra.mxu0 0
    %455 = vmatprep.mubr.bf16.mxu0 %v380
    %456 = vmatmul.mubr.bf16.gmra.mrb[0].mxu0 %v373
    %v457 = vpop.f32.mrb[0].mxu0
    %v458 = vadd.f32 %v417, %v457
    %v459 = vpop.f32.mrb[0].mxu0
    %v460 = vpop.f32.mrb[0].mxu0
    %v461 = vadd.f32 %v420, %v460
    %v462 = vpop.f32.mrb[0].mxu0
    %463 = vdwg.mxu0
    %v464 = vmax.f32 %v458, 0.0
    %v465 = vmax.f32 %v461, 0.0
    %v466 = vpack.c.bf16 %v465, %v464
    %468 = vrot.lane.b32.xlu0 %v466, 5
    %v469 = vpop.permute.xlu0 %468
    %v471 = vsel %vm128, 0, %v469
    %v472 = vsel %vm134, %v471, 0
    %v474 = vmul.bf16 %v472, %v145
    %v475 = vmul.bf16 %v472, %v157
    %v476 = vmul.bf16 %v472, %v167
    %v477 = vmul.bf16 %v472, %v177
    %v478 = vmul.bf16 %v472, %v187
    %v479 = vmul.bf16 %v472, %v197
    %v480 = vmul.bf16 %v472, %v207
    %v481 = vmul.bf16 %v472, %v220
    %483 = vrot.lane.b32.xlu0 %v475, 127
    %v484 = vpop.permute.xlu0 %483
    %487 = vrot.lane.b32.xlu0 %v476, 126
    %v488 = vpop.permute.xlu0 %487
    %491 = vrot.lane.b32.xlu0 %v477, 124
    %v492 = vpop.permute.xlu0 %491
    %495 = vrot.lane.b32.xlu0 %v472, 123
    %v496 = vpop.permute.xlu0 %495
    %499 = vrot.lane.b32.xlu0 %v478, 122
    %v500 = vpop.permute.xlu0 %499
    %503 = vrot.lane.b32.xlu0 %v479, 120
    %v504 = vpop.permute.xlu0 %503
    %507 = vrot.lane.b32.xlu0 %v480, 119
    %v508 = vpop.permute.xlu0 %507
    %511 = vrot.lane.b32.xlu0 %v481, 118
    %v512 = vpop.permute.xlu0 %511
    %v514 = vld [vmem:[%s6] sm:$0xff]
    %v515 = vld [vmem:[%s6 + $0x8] sm:$0xff]
    %v516 = vld [vmem:[%s7] sm:$0xff]
    %v517 = vld [vmem:[%s7 + $0x8] sm:$0xff]
    %519 = vset.pattern.permute.xlu0 0
    %520 = vperm.xlu0 %519, %v516
    %v521 = vpop.permute.xlu0 %520
    %524 = vset.pattern.permute.xlu0 0
    %525 = vperm.xlu0 %524, %v517
    %v526 = vpop.permute.xlu0 %525
    %v530 = vunpack.c.l.b16 %v514
    %v531 = vunpack.c.h.b16 %v514
    %v532 = vunpack.c.l.b16 %v515
    %v533 = vunpack.c.h.b16 %v515
    %v534 = vpack.c.b16 %v532, %v530
    %v535 = vpack.c.b16 %v533, %v531
    %vm537 = vcmask 130048
    %v539 = vsel %vm537, %v535, 0
    %541 = vmatprep.subr.bf16.mxu0 0
    %542 = vmatpush1.bf16.msra.mxu0 %v474
    %543 = vmatprep.subr.bf16.mxu0 0
    %544 = vmatpush1.bf16.msra.mxu0 %v484
    %545 = vmatprep.subr.bf16.mxu0 0
    %546 = vmatpush1.bf16.msra.mxu0 %v488
    %547 = vmatprep.subr.bf16.mxu0 0
    %548 = vmatpush1.bf16.msra.mxu0 %v492
    %549 = vmatprep.subr.bf16.mxu0 0
    %550 = vmatpush1.bf16.msra.mxu0 %v496
    %551 = vmatprep.subr.bf16.mxu0 0
    %552 = vmatpush1.bf16.msra.mxu0 %v500
    %553 = vmatprep.subr.bf16.mxu0 0
    %554 = vmatpush1.bf16.msra.mxu0 %v504
    %555 = vmatprep.subr.bf16.mxu0 0
    %556 = vmatpush1.bf16.msra.mxu0 %v508
    %557 = vmatprep.subr.bf16.mxu0 0
    %558 = vmatpush1.bf16.msra.mxu0 %v512
    %559 = vmatprep.subr.bf16.mxu0 0
    %560 = vmatpush1.bf16.msra.mxu0 0
    %561 = vmatprep.subr.bf16.mxu0 0
    %562 = vmatpush1.bf16.msra.mxu0 0
    %563 = vmatprep.subr.bf16.mxu0 0
    %564 = vmatpush1.bf16.msra.mxu0 0
    %565 = vmatprep.subr.bf16.mxu0 0
    %566 = vmatpush1.bf16.msra.mxu0 0
    %567 = vmatprep.subr.bf16.mxu0 0
    %568 = vmatpush1.bf16.msra.mxu0 0
    %569 = vmatprep.subr.bf16.mxu0 0
    %570 = vmatpush1.bf16.msra.mxu0 0
    %571 = vmatprep.subr.bf16.mxu0 0
    %572 = vmatpush1.bf16.msra.mxu0 0
    %573 = vmatprep.mubr.bf16.mxu0 %v539
    %574 = vmatmul.mubr.bf16.gmra.mrb[0].mxu0 %v534
    %v575 = vpop.f32.mrb[0].mxu0
    %v576 = vadd.f32 %v521, %v575
    %v577 = vpop.f32.mrb[0].mxu0
    %v578 = vpop.f32.mrb[0].mxu0
    %v579 = vadd.f32 %v526, %v578
    %v580 = vpop.f32.mrb[0].mxu0
    %581 = vdwg.mxu0
    %v582 = vmax.f32 %v576, 0.0
    %v583 = vmax.f32 %v579, 0.0
    %v584 = vpack.c.bf16 %v583, %v582
    %v586 = vunpack.c.l.b16 %v584
    %v587 = vunpack.c.h.b16 %v584
    %v588 = vpack.c.b16 %v586, %v586
    %v589 = vpack.c.b16 %v587, %v587
    %vm592 = vcmask 257024
    %593 = vst.msk [vmem:[#allocation5] sm:$0xf] %vm592, %v588
    %594 = vst.msk [vmem:[#allocation5 + $0x4] sm:$0xf] %vm592, %v589
    // Predicated region
    $region38: #{tpu_custom_call.1} parent=1 // pred_check
      _
    $region39: #{tpu_custom_call.1} parent=1 // pred_check_branch
      %596 = sbr.rel (0) target = $region41
    $region40: #{tpu_custom_call.1} parent=1 // pred_region
      %s598 = ssub.s32 128, 128
      %599 = vsyncadd [#allocation4], %s598
      %s600 = sshll.u32 [#allocation5], 4
      %s601 = int_to_ptr.vmem [resolvable:$true] %s600
      %606 = dma.vmem_to_hbm [thread:$0]  %s601, 128, %s8, [#allocation4], 64, 64, 4
    $region41: #{tpu_custom_call.1} parent=1 // pred_fallthru
      _
    // Predicated region
    $region42: #{tpu_custom_call.1} parent=1 // pred_check
      _
    $region43: #{tpu_custom_call.1} parent=1 // pred_check_branch
      %608 = sbr.rel (0) target = $region45
    $region44: #{tpu_custom_call.1} parent=1 // pred_region
      %609 = dma.done [#allocation4], 128
    $region45: #{tpu_custom_call.1} parent=1 // pred_fallthru
      _
    %610 = vsyncpa [#allocation3], 1
    %611 = vsyncpa [#allocation4], 1

</llo_original>
